<compile_context>
chip_gen: v5e
topology: v5e:2x2
jax: 0.10.0
libtpu: 0.0.40
codegen_flags: <defaults>
</compile_context>

<pallas_src>
import functools

import jax
import jax.numpy as jnp
from jax import lax
from jax.experimental import pallas as pl
from jax.experimental.pallas import tpu as pltpu

_EPS = 1e-12            # F.normalize default eps: denominator = max(||v||, eps)
_EPS_SQ = _EPS * _EPS   # clamp the sum of squares (sqrt(max(ss,eps^2)) == max(||v||,eps))


def _round_up(a, b):
    return ((a + b - 1) // b) * b


def _physical_vmem_bytes():
    """Per-core VMEM capacity; conservative (v7x) fallback if the query fails."""
    try:
        info = pltpu.get_tpu_info()
        cap = getattr(info, "vmem_capacity_bytes", None)
        if cap:
            return int(cap)
    except Exception:
        pass
    return 64 * 1024 * 1024


def weight_col_inv_norm(weight):
    """1 / max(||w[:, j]||_2, eps) as a (1, N) f32 vector.

    Static per layer — compute once per weight update and pass to normed_linear().
    """
    w = weight.astype(jnp.float32)
    ss = jnp.sum(w * w, axis=0, keepdims=True)
    return lax.rsqrt(jnp.maximum(ss, _EPS_SQ))


# ---------------------------------------------------------------------------- kernels ---
def _tile_kernel(x_ref, w_ref, winv_ref, o_ref, *, compute_dtype):
    """One (tm, tn) output tile with the full K resident (weight-stationary and
    2-D-grid variants).  Normalization is applied as output scaling."""
    xf = x_ref[...].astype(jnp.float32)
    row_inv = lax.rsqrt(jnp.maximum(jnp.sum(xf * xf, axis=-1, keepdims=True), _EPS_SQ))
    s = jnp.dot(x_ref[...].astype(compute_dtype),
                w_ref[...].astype(compute_dtype),
                preferred_element_type=jnp.float32)
    o_ref[...] = (s * row_inv * winv_ref[...]).astype(o_ref.dtype)


def _ktiled_kernel(x_ref, w_ref, winv_ref, o_ref, acc_ref, ss_ref, *, compute_dtype):
    """K-tiled variant: f32 accumulator + row sum-of-squares accumulated across the
    (last, "arbitrary") K grid axis; inverse-norm scaling applied at the final K step."""
    k = pl.program_id(2)

    @pl.when(k == 0)
    def _():
        acc_ref[...] = jnp.zeros_like(acc_ref)
        ss_ref[...] = jnp.zeros_like(ss_ref)

    xf = x_ref[...].astype(jnp.float32)
    ss_ref[...] += jnp.sum(xf * xf, axis=-1, keepdims=True)
    acc_ref[...] += jnp.dot(x_ref[...].astype(compute_dtype),
                            w_ref[...].astype(compute_dtype),
                            preferred_element_type=jnp.float32)

    @pl.when(k == pl.num_programs(2) - 1)
    def _():
        row_inv = lax.rsqrt(jnp.maximum(ss_ref[...], _EPS_SQ))
        o_ref[...] = (acc_ref[...] * row_inv * winv_ref[...]).astype(o_ref.dtype)


# ---------------------------------------------------------------------------- wrapper ---
def normed_linear(x, weight, w_inv=None, *,
                  tile_m=None, tile_n=None, tile_k=None,
                  compute_dtype=jnp.bfloat16, out_dtype=jnp.float32,
                  variant=None):
    """normalize(x, dim=1) @ normalize(weight, dim=0) as a single fused Pallas call.

    x: (M, K), weight: (K, N).  w_inv: optional precomputed (1, N) column inverse
    norms (weight_col_inv_norm(weight)); pass it to avoid recomputing per call.
    variant: None (auto) | "ws" (weight-stationary) | "2d" | "ktiled".
    """
    M, K = x.shape
    Kw, N = weight.shape
    assert K == Kw, (K, Kw)
    out_dtype = jnp.dtype(out_dtype)

    if w_inv is None:
        w_inv = weight_col_inv_norm(weight)
    w_inv = jnp.asarray(w_inv, jnp.float32).reshape(1, N)

    xb = jnp.dtype(x.dtype).itemsize
    wb = jnp.dtype(weight.dtype).itemsize
    ob = out_dtype.itemsize

    # --- generation-aware VMEM budget (v7x: 64 MiB physical, v5e/v6e: 128 MiB) ----------
    phys = _physical_vmem_bytes()
    vmem_limit = min(phys * 3 // 4, 112 * 1024 * 1024)
    budget = int(vmem_limit * 0.8)          # double-buffered blocks + cast temporaries
    big_vmem = budget >= 48 * 1024 * 1024

    if tile_m is None:
        tile_m = 512 if big_vmem else 256
    if tile_n is None:
        tile_n = 512 if big_vmem else 256
    if tile_k is None:
        tile_k = 512

    def _fits(nbytes):
        return nbytes <= budget

    def _cparams(dims):
        return pltpu.CompilerParams(dimension_semantics=dims,
                                    vmem_limit_bytes=int(vmem_limit))

    kern = functools.partial(_tile_kernel, compute_dtype=compute_dtype)
    out_shape = jax.ShapeDtypeStruct((M, N), out_dtype)

    # A block dim is legal if it is a multiple of (8 | 128) OR equals the full dim.
    tm = M if M <= tile_m else tile_m
    tn = N if N <= tile_n else tile_n

    # --- variant auto-selection ----------------------------------------------------------
    def _ws_bytes(tm_):          # whole weight resident (single-buffered) + 2x x/out + headroom
        return 3 * (K * N * wb + 2 * tm_ * K * xb + 2 * tm_ * N * ob) // 2

    def _2d_bytes(tm_, tn_):     # double-buffered full-K blocks + cast headroom
        return 3 * (tm_ * K * xb + K * tn_ * wb + tm_ * tn_ * ob)

    if variant is None:
        tm_ws = tm
        while not _fits(_ws_bytes(tm_ws)) and tm_ws > 8:
            tm_ws = max(8, _round_up(tm_ws // 2, 8))
        if _fits(_ws_bytes(tm_ws)):
            variant, tm = "ws", tm_ws
        else:
            tm2, tn2 = tm, tn
            while not _fits(_2d_bytes(tm2, tn2)) and (tm2 > 8 or tn2 > 128):
                if tn2 > 128 and (tn2 >= tm2 or tm2 <= 8):
                    tn2 = max(128, _round_up(tn2 // 2, 128))
                else:
                    tm2 = max(8, _round_up(tm2 // 2, 8))
            if _fits(_2d_bytes(tm2, tn2)):
                variant, tm, tn = "2d", tm2, tn2
            else:
                variant = "ktiled"           # K too large for full-K blocks

    # --- weight-stationary: 1-D grid over M, whole weight resident in VMEM --------------
    if variant == "ws":
        if pl.cdiv(M, tm) < 2 and M >= 16:   # give megacore (v7x) >= 2 blocks when possible
            tm = _round_up(pl.cdiv(M, 2), 8)
        grid = (pl.cdiv(M, tm),)
        return pl.pallas_call(
            kern,
            out_shape=out_shape,
            grid_spec=pltpu.PrefetchScalarGridSpec(
                num_scalar_prefetch=0,
                grid=grid,
                in_specs=[
                    pl.BlockSpec((tm, K), lambda i: (i, 0)),   # x: M tile, full K
                    pl.BlockSpec((K, N), lambda i: (0, 0)),    # weight: DMA'd once, resident
                    pl.BlockSpec((1, N), lambda i: (0, 0)),    # precomputed col inv norms
                ],
                out_specs=pl.BlockSpec((tm, N), lambda i: (i, 0)),
            ),
            compiler_params=_cparams(("parallel",)),
        )(x, weight, w_inv)

    # --- 2-D (M, N) grid, full K per block ------------------------------------------------
    if variant == "2d":
        gm, gn = pl.cdiv(M, tm), pl.cdiv(N, tn)
        if gm * gn < 2:                      # megacore: ensure >= 2 blocks on a parallel axis
            if N >= 256:
                tn = _round_up(pl.cdiv(N, 2), 128)
            elif M >= 16:
                tm = _round_up(pl.cdiv(M, 2), 8)
            gm, gn = pl.cdiv(M, tm), pl.cdiv(N, tn)

        if K * N * wb > M * K * xb:
            # weight is the larger operand: make M the inner (fastest) grid axis so the
            # (K, tn) weight block stays resident across the inner loop.
            grid = (gn, gm)
            in_specs = [
                pl.BlockSpec((tm, K), lambda j, i: (i, 0)),
                pl.BlockSpec((K, tn), lambda j, i: (0, j)),
                pl.BlockSpec((1, tn), lambda j, i: (0, j)),
            ]
            out_specs = pl.BlockSpec((tm, tn), lambda j, i: (i, j))
        else:
            grid = (gm, gn)
            in_specs = [
                pl.BlockSpec((tm, K), lambda i, j: (i, 0)),
                pl.BlockSpec((K, tn), lambda i, j: (0, j)),
                pl.BlockSpec((1, tn), lambda i, j: (0, j)),
            ]
            out_specs = pl.BlockSpec((tm, tn), lambda i, j: (i, j))

        return pl.pallas_call(
            kern,
            out_shape=out_shape,
            grid_spec=pltpu.PrefetchScalarGridSpec(
                num_scalar_prefetch=0, grid=grid,
                in_specs=in_specs, out_specs=out_specs),
            compiler_params=_cparams(("parallel", "parallel")),
        )(x, weight, w_inv)

    # --- K-tiled accumulator grid (very large K) ------------------------------------------
    tk = _round_up(min(tile_k, _round_up(K, 128)), 128)

    def _k_bytes(tm_, tn_, tk_):
        return (3 * (tm_ * tk_ * xb + tk_ * tn_ * wb + tm_ * tn_ * ob)
                + 4 * tm_ * (tn_ + 1))
    while not _fits(_k_bytes(tm, tn, tk)) and (tm > 8 or tn > 128 or tk > 128):
        if tk > 128:
            tk = max(128, _round_up(tk // 2, 128))
        elif tn > 128 and (tn >= tm or tm <= 8):
            tn = max(128, _round_up(tn // 2, 128))
        else:
            tm = max(8, _round_up(tm // 2, 8))

    Kp = _round_up(K, tk)
    if Kp != K:
        # zero K-padding is exact: zeros contribute nothing to the dot or the row sumsq.
        x = jnp.pad(x, ((0, 0), (0, Kp - K)))
        weight = jnp.pad(weight, ((0, Kp - K), (0, 0)))

    gm, gn, gk = pl.cdiv(M, tm), pl.cdiv(N, tn), Kp // tk
    kern_k = functools.partial(_ktiled_kernel, compute_dtype=compute_dtype)
    return pl.pallas_call(
        kern_k,
        out_shape=out_shape,
        grid_spec=pltpu.PrefetchScalarGridSpec(
            num_scalar_prefetch=0,
            grid=(gm, gn, gk),
            in_specs=[
                pl.BlockSpec((tm, tk), lambda i, j, k: (i, k)),
                pl.BlockSpec((tk, tn), lambda i, j, k: (k, j)),
                pl.BlockSpec((1, tn), lambda i, j, k: (0, j)),
            ],
            out_specs=pl.BlockSpec((tm, tn), lambda i, j, k: (i, j)),
            scratch_shapes=[
                pltpu.VMEM((tm, tn), jnp.float32),   # f32 accumulator
                pltpu.VMEM((tm, 1), jnp.float32),    # row sum-of-squares accumulator
            ],
        ),
        compiler_params=_cparams(("parallel", "parallel", "arbitrary")),
    )(x, weight, w_inv)


# ----------------------------------------------------------------- parameter creation ---
def make_normed_linear_weight(key, in_features, out_features):
    """Test scaffolding ~ weight.data.uniform_(-1,1).renorm_(2,1,1e-5).mul_(1e5)
    (approximately unit-norm columns; not a bit-exact renorm_ reproduction)."""
    w = jax.random.uniform(key, (in_features, out_features), jnp.float32, -1.0, 1.0)
    col = jnp.sqrt(jnp.sum(w * w, axis=0, keepdims=True))
    scale = jnp.where(col > 1e-5, 1e-5 / (col + 1e-7), 1.0) * 1e5
    return w * scale


# --------------------------------------------------------------------------- reference ---
def _reference(x, weight):
    xn = x / jnp.maximum(jnp.linalg.norm(x, axis=1, keepdims=True), _EPS)
    wn = weight / jnp.maximum(jnp.linalg.norm(weight, axis=0, keepdims=True), _EPS)
    return xn @ wn


# -------------------------------------------------------------------------------- main ---
if __name__ == "__main__":
    key = jax.random.PRNGKey(0)
    kx, kw, kx2, kw2 = jax.random.split(key, 4)

    # Module-scale shapes: NormedLinear(in_features=32, out_features=16), batch=4.
    batch, in_features, out_features = 4, 32, 16
    x = jax.random.normal(kx, (batch, in_features), jnp.float32)
    weight = make_normed_linear_weight(kw, in_features, out_features)
    w_inv = weight_col_inv_norm(weight)          # computed once per weight, like a layer would

    ref = _reference(x, weight)

    # Default path: auto variant (weight-stationary here) with bf16 MXU operands.
    out_bf16 = jax.block_until_ready(normed_linear(x, weight, w_inv))
    assert out_bf16.shape == (batch, out_features), out_bf16.shape
    err = float(jnp.max(jnp.abs(out_bf16 - ref)))
    assert err < 2e-2, ("bf16 path", err)

    # Exact path: f32 MXU operands (tight tolerance).
    out_f32 = jax.block_until_ready(
        normed_linear(x, weight, w_inv, compute_dtype=jnp.float32))
    err = float(jnp.max(jnp.abs(out_f32 - ref)))
    assert err < 1e-4, ("f32 path", err)

    # Exercise the 2-D and K-tiled variants on slightly larger, unaligned shapes.
    M2, K2, N2 = 48, 160, 272
    x2 = jax.random.normal(kx2, (M2, K2), jnp.float32)
    w2 = jax.random.normal(kw2, (K2, N2), jnp.float32)
    ref2 = _reference(x2, w2)

    out_2d = jax.block_until_ready(
        normed_linear(x2, w2, variant="2d", tile_m=32, tile_n=128))
    assert out_2d.shape == (M2, N2), out_2d.shape
    assert float(jnp.max(jnp.abs(out_2d - ref2))) < 2e-2

    out_kt = jax.block_until_ready(
        normed_linear(x2, w2, variant="ktiled", tile_m=32, tile_n=128, tile_k=128))
    assert out_kt.shape == (M2, N2), out_kt.shape
    assert float(jnp.max(jnp.abs(out_kt - ref2))) < 2e-2

    print("KERNEL_OK")
</pallas_src>

<mosaic_0001>
module attributes {stable_mosaic.version = 11 : i64} {
  func.func @_tile_kernel(%arg0: i32, %arg1: memref<4x32xf32, #tpu.memory_space<vmem>>, %arg2: memref<32x16xf32, #tpu.memory_space<vmem>>, %arg3: memref<1x16xf32, #tpu.memory_space<vmem>>, %arg4: memref<4x16xf32, #tpu.memory_space<vmem>>) attributes {dimension_semantics = [#tpu.dimension_semantics<parallel>], iteration_bounds = array<i64: 1>, scalar_prefetch = 0 : i64, scratch_operands = 0 : i64, tpu.core_type = #tpu.core_type<tc>, window_params = [{transform_indices = @transform_0, window_bounds = array<i64: 4, 32>}, {pipeline_mode = #tpu.pipeline_mode<synchronous>, transform_indices = @transform_1, window_bounds = array<i64: 32, 16>}, {pipeline_mode = #tpu.pipeline_mode<synchronous>, transform_indices = @transform_2, window_bounds = array<i64: 1, 16>}, {transform_indices = @transform_3, window_bounds = array<i64: 4, 16>}]} {
    %c0 = arith.constant 0 : index
    %c0_0 = arith.constant 0 : index
    %0 = vector.load %arg1[%c0, %c0_0] : memref<4x32xf32, #tpu.memory_space<vmem>>, vector<4x32xf32>
    %1 = arith.mulf %0, %0 : vector<4x32xf32>
    %cst = arith.constant dense<0.000000e+00> : vector<4xf32>
    %2 = vector.multi_reduction <add>, %1, %cst [1] : vector<4x32xf32> to vector<4xf32>
    %3 = vector.shape_cast %2 : vector<4xf32> to vector<4x1xf32>
    %cst_1 = arith.constant 1.000000e-24 : f32
    %4 = vector.broadcast %cst_1 : f32 to vector<4x1xf32>
    %5 = arith.maximumf %3, %4 : vector<4x1xf32>
    %6 = math.rsqrt %5 : vector<4x1xf32>
    %c0_2 = arith.constant 0 : index
    %c0_3 = arith.constant 0 : index
    %7 = vector.load %arg1[%c0_2, %c0_3] : memref<4x32xf32, #tpu.memory_space<vmem>>, vector<4x32xf32>
    %8 = arith.truncf %7 : vector<4x32xf32> to vector<4x32xbf16>
    %c0_4 = arith.constant 0 : index
    %c0_5 = arith.constant 0 : index
    %9 = vector.load %arg2[%c0_4, %c0_5] : memref<32x16xf32, #tpu.memory_space<vmem>>, vector<32x16xf32>
    %10 = arith.truncf %9 : vector<32x16xf32> to vector<32x16xbf16>
    %cst_6 = arith.constant dense<0.000000e+00> : vector<4x16xf32>
    %11 = tpu.matmul %8, %10, %cst_6 {dimension_numbers = #tpu.dot_dimension_numbers<[1], [0], [0], [1], [0, 0, 1, 1], [], []>} : vector<4x32xbf16>, vector<32x16xbf16>, vector<4x16xf32> -> vector<4x16xf32>
    %12 = vector.broadcast %6 : vector<4x1xf32> to vector<4x16xf32>
    %13 = arith.mulf %11, %12 : vector<4x16xf32>
    %c0_7 = arith.constant 0 : index
    %c0_8 = arith.constant 0 : index
    %14 = vector.load %arg3[%c0_7, %c0_8] : memref<1x16xf32, #tpu.memory_space<vmem>>, vector<1x16xf32>
    %15 = vector.broadcast %14 : vector<1x16xf32> to vector<4x16xf32>
    %16 = arith.mulf %13, %15 : vector<4x16xf32>
    %c0_9 = arith.constant 0 : index
    %c0_10 = arith.constant 0 : index
    %17 = vector.load %arg4[%c0_9, %c0_10] : memref<4x16xf32, #tpu.memory_space<vmem>>, vector<4x16xf32>
    tpu.vector_store %arg4[%c0_9, %c0_10], %16 {strides = array<i32>} : memref<4x16xf32, #tpu.memory_space<vmem>>, vector<4x16xf32>,
    return
  }
  func.func @transform_0(%arg0: i32) -> (i32, i32) {
    %c0_i32 = arith.constant 0 : i32
    %c0_i32_0 = arith.constant 0 : i32
    return %arg0, %c0_i32 : i32, i32
  }
  func.func @transform_1(%arg0: i32) -> (i32, i32) {
    %c0_i32 = arith.constant 0 : i32
    %c0_i32_0 = arith.constant 0 : i32
    %c0_i32_1 = arith.constant 0 : i32
    return %c0_i32, %c0_i32_0 : i32, i32
  }
  func.func @transform_2(%arg0: i32) -> (i32, i32) {
    %c0_i32 = arith.constant 0 : i32
    %c0_i32_0 = arith.constant 0 : i32
    %c0_i32_1 = arith.constant 0 : i32
    return %c0_i32, %c0_i32_0 : i32, i32
  }
  func.func @transform_3(%arg0: i32) -> (i32, i32) {
    %c0_i32 = arith.constant 0 : i32
    %c0_i32_0 = arith.constant 0 : i32
    return %arg0, %c0_i32 : i32, i32
  }
}

</mosaic_0001>

<llo_original>
// kernel: tpu_custom_call.1
$region0: #{tpu_custom_call.1}
  #allocation0 [shape = 'u32[]', space=smem, size = 0x4, offset = 0x4, fixed_abs, tag = 'smem constant byte address 0x4 - core index']
  #allocation1 [shape = 'u32[72,128]{1,0:T(1,128)}', space=vmem, size = 0x9000, scoped, tag = 'internal scratch']
  %s0 = inlined_call_operand.vmem [shape: f32[4,32], index: 0, kind: input, shape index: {}]
  %s1 = inlined_call_operand.vmem [shape: f32[32,16], index: 1, kind: input, shape index: {}]
  %s2 = inlined_call_operand.vmem [shape: f32[1,16], index: 2, kind: input, shape index: {}]
  %s3 = inlined_call_operand.hbm [shape: f32[4,16], index: 3, kind: output, shape index: {}]
  %s4 = sld [smem:[#allocation0]]
  $region22: #{tpu_custom_call.1} parent=0
    _
  %s6 = ssub.s32 1, %s4
  %s7 = scalar_select 0, %s6, %s4
  $region1: #{tpu_custom_call.1} parent=0
    #allocation2 [shape = 'u8[2048]{0}', space=vmem, size = 0x800, scoped, tag = 'output window, operand 0, single buffered']
    #allocation3 [shape = 's32[1]{0}', space=sflag, size = 0x4, scoped, tag = 'scoped memory for tpu_custom_call.1']
    %8 = vsyncpa [#allocation3], 0
    // Predicated region
    $region2: #{tpu_custom_call.1} parent=1 // pred_check
      _
    $region3: #{tpu_custom_call.1} parent=1 // pred_check_branch
      %10 = sbr.rel (0) target = $region5
    $region4: #{tpu_custom_call.1} parent=1 // pred_region
      _
    $region5: #{tpu_custom_call.1} parent=1 // pred_fallthru
      _
    // Predicated region
    $region6: #{tpu_custom_call.1} parent=1 // pred_check
      _
    $region7: #{tpu_custom_call.1} parent=1 // pred_check_branch
      %12 = sbr.rel (0) target = $region9
    $region8: #{tpu_custom_call.1} parent=1 // pred_region
      _
    $region9: #{tpu_custom_call.1} parent=1 // pred_fallthru
      _
    // Predicated region
    $region10: #{tpu_custom_call.1} parent=1 // pred_check
      _
    $region11: #{tpu_custom_call.1} parent=1 // pred_check_branch
      %14 = sbr.rel (0) target = $region13
    $region12: #{tpu_custom_call.1} parent=1 // pred_region
      _
    $region13: #{tpu_custom_call.1} parent=1 // pred_fallthru
      _
    %v16 = vld [vmem:[%s0] sm:$0xf]
    %v17 = vmul.f32 %v16, %v16
    %vm18 = vcmask 257024
    %v19 = vsel %vm18, %v17, 0.0
    %20 = vadd.xlane.f32.xlu0 %v19
    %v21 = vpop.xlane.xlu0 %20
    %v22 = vmax.f32 %v21, 1e-24
    %v23 = vrsqrt.pop %v22
    %v24 = vmul.f32 %v23, %v22
    %v25 = vmul.f32 %v24, %v23
    %v26 = vmul.f32 0.5, %v25
    %v27 = vsub.f32 1.5, %v26
    %v28 = vmul.f32 %v23, %v27
    %vm29 = vweird.f32 %v22
    %vm30 = vweird.f32 %v23
    %vm31 = vmor %vm29, %vm30
    %v32 = vsel %vm31, %v23, %v28
    %v33 = vpack.c.bf16 %v16, %v16
    %v34 = vld [vmem:[%s1] sm:$0xff]
    %v35 = vld [vmem:[%s1 + $0x8] sm:$0xff]
    %v36 = vld [vmem:[%s1 + $0x10] sm:$0xff]
    %v37 = vld [vmem:[%s1 + $0x18] sm:$0xff]
    %v38 = vpack.c.bf16 %v35, %v34
    %v39 = vpack.c.bf16 %v37, %v36
    %vm40 = vcmask 261120
    %v42 = vsel %vm40, %v33, 0
    %44 = vmatpush.bf16.msra.mxu0 0
    %45 = vmatpush.bf16.msra.mxu0 0
    %46 = vmatpush.bf16.msra.mxu0 0
    %47 = vmatpush.bf16.msra.mxu0 0
    %48 = vmatpush.bf16.msra.mxu0 0
    %49 = vmatpush.bf16.msra.mxu0 0
    %50 = vmatpush.bf16.msra.mxu0 %v39
    %51 = vmatpush.bf16.msra.mxu0 %v38
    %52 = vmatmul.bf16.gmra.mxu0 %v42
    %v53 = vpop.f32.mrf.mxu0
    %v54 = vadd.f32 0.0, %v53
    %v55 = vpop.f32.mrf.mxu0
    %56 = vdwg.mxu0
    %v57 = vmul.f32 %v54, %v32
    %v58 = vld [vmem:[%s2] sm:$0x1]
    %v60 = vperm.slane %v58, 0
    %v62 = vmul.f32 %v57, %v60
    %vm63 = vcmask 125952
    %64 = vst.msk [vmem:[#allocation2] sm:$0xf] %vm63, %v62
    // Predicated region
    $region14: #{tpu_custom_call.1} parent=1 // pred_check
      _
    $region15: #{tpu_custom_call.1} parent=1 // pred_check_branch
      %66 = sbr.rel (0) target = $region17
    $region16: #{tpu_custom_call.1} parent=1 // pred_region
      %68 = vsyncadd [#allocation3], 0
      %s70 = sshll.u32 [#allocation2], 4
      %s71 = int_to_ptr.vmem [resolvable:$true] %s70
      %s72 = sshll.u32 %s3, 4
      %s73 = int_to_ptr.hbm [resolvable:$true] %s72
      %75 = dma.vmem_to_hbm [thread:$0]  %s71, 64, %s73, [#allocation3]
    $region17: #{tpu_custom_call.1} parent=1 // pred_fallthru
      _
    // Predicated region
    $region18: #{tpu_custom_call.1} parent=1 // pred_check
      _
    $region19: #{tpu_custom_call.1} parent=1 // pred_check_branch
      %77 = sbr.rel (0) target = $region21
    $region20: #{tpu_custom_call.1} parent=1 // pred_region
      %79 = dma.done [#allocation3], 64
    $region21: #{tpu_custom_call.1} parent=1 // pred_fallthru
      _
    %80 = vsyncpa [#allocation3], 1

</llo_original>
